<compile_context>
chip_gen: v7x
topology: tpu7x:2x2x1
jax: 0.10.0
libtpu: 0.0.40
codegen_flags: <defaults>
</compile_context>

<pallas_src>
import functools

import jax
import jax.numpy as jnp
from jax.experimental import pallas as pl
from jax.experimental.pallas import tpu as pltpu


def _round_up(x, m):
    return (x + m - 1) // m * m


def _agg_kernel(nz_ref, a_ref, xw_ref, b_ref, alpha_ref, o_ref, acc_ref, *, nk):
    """One (row-tile i, k-tile k) step of out = PReLU(A_hat @ XW + b).

    nz_ref:    [ni*nk]  int32 SMEM (scalar prefetch): 1 if A block (i,k) nonzero
    a_ref:     [TM, TK] bf16  A_hat tile
    xw_ref:    [TK, Hp] bf16  (X @ W) k-slab
    b_ref:     [1,  Hp] f32   GCNConv bias
    alpha_ref: [1]      f32   PReLU slope (SMEM)
    o_ref:     [TM, Hp] f32   output row tile (resident across the k axis)
    acc_ref:   [TM, Hp] f32   VMEM accumulator scratch
    """
    i = pl.program_id(0)
    k = pl.program_id(1)

    @pl.when(k == 0)
    def _init():
        acc_ref[...] = jnp.zeros_like(acc_ref)

    # Block-sparse compute skip: all-zero adjacency tiles contribute nothing.
    # TODO(synk): also skip the A-tile DMA via a data-dependent index_map built
    # from per-row nonzero block lists instead of just skipping the matmul.
    @pl.when(nz_ref[i * nk + k] != 0)
    def _accumulate():
        acc_ref[...] += jnp.dot(a_ref[...], xw_ref[...],
                                preferred_element_type=jnp.float32)

    # Epilogue only on the last k step: bias + PReLU, lane-dense f32 store.
    @pl.when(k == pl.num_programs(1) - 1)
    def _finalize():
        alpha = alpha_ref[0]
        out = acc_ref[...] + b_ref[...]
        o_ref[...] = jnp.where(out >= 0.0, out, alpha * out).astype(o_ref.dtype)


def build_normalized_adj(edge_index, num_nodes):
    """Dense GCNConv normalization: D^-1/2 (A + I) D^-1/2 (plain-JAX glue)."""
    row, col = edge_index[0], edge_index[1]
    a = jnp.zeros((num_nodes, num_nodes), jnp.float32)
    a = a.at[row, col].add(1.0)
    a = a + jnp.eye(num_nodes, dtype=jnp.float32)       # add self-loops
    deg = jnp.sum(a, axis=1)
    dinv = jnp.where(deg > 0, 1.0 / jnp.sqrt(deg), 0.0)
    return dinv[:, None] * a * dinv[None, :]


def dgi_forward(seq, edge_index, w, b, alpha, *, tile=512):
    """DGI.forward(seq, adj) == PReLU(GCNConv(seq, edge_index))."""
    n, _ = seq.shape
    n_h = w.shape[1]

    # --- glue: normalization + hoisted feature transform (unpadded X @ W) ---
    a_hat = build_normalized_adj(edge_index, n)
    xw = jnp.dot(seq.astype(jnp.float32), w.astype(jnp.float32))

    # --- tile plan ---
    hp = _round_up(n_h, 128)                 # lane-dense output width
    t = tile                                 # TM = TK = t (multiple of 256 when big)
    while t > 128 and t > _round_up(n, 128):
        t //= 2
    np_ = _round_up(n, t)
    ni = nk = np_ // t
    tm, tk = t, t

    # --- pad + cast MXU operands to bf16 (f32 accumulation in-kernel) ---
    a_p = jnp.zeros((np_, np_), jnp.bfloat16).at[:n, :n].set(
        a_hat.astype(jnp.bfloat16))
    xw_p = jnp.zeros((np_, hp), jnp.bfloat16).at[:n, :n_h].set(
        xw.astype(jnp.bfloat16))
    b_p = jnp.zeros((1, hp), jnp.float32).at[0, :n_h].set(b.astype(jnp.float32))
    alpha_arr = jnp.asarray([alpha], jnp.float32)

    # Block-sparsity metadata for the scalar-prefetch skip (flat 1-D -> tiny SMEM).
    nz = jnp.any(a_p.reshape(ni, tm, nk, tk) != 0, axis=(1, 3))
    nz = nz.reshape(-1).astype(jnp.int32)

    # --- VMEM budget (double-buffered tiles + accumulator), capped for v7x ---
    vmem_bytes = (2 * tm * tk * 2        # A tiles, 2 buffers, bf16
                  + 2 * tk * hp * 2      # XW slabs, 2 buffers, bf16
                  + 2 * hp * 4           # bias
                  + 2 * tm * hp * 4      # output row tile, 2 buffers, f32
                  + tm * hp * 4)         # accumulator scratch
    vmem_limit = int(min(max(2 * vmem_bytes, 16 << 20), 64 << 20))

    cost = pl.CostEstimate(
        flops=2 * np_ * np_ * hp,
        transcendentals=0,
        bytes_accessed=np_ * np_ * 2 + np_ * hp * 2 + np_ * hp * 4 + hp * 4,
    )

    grid_spec = pltpu.PrefetchScalarGridSpec(
        num_scalar_prefetch=1,
        grid=(ni, nk),
        in_specs=[
            pl.BlockSpec((tm, tk), lambda i, k, nz_ref: (i, k)),   # A_hat tile
            pl.BlockSpec((tk, hp), lambda i, k, nz_ref: (k, 0)),   # XW k-slab
            pl.BlockSpec((1, hp), lambda i, k, nz_ref: (0, 0)),    # bias
            pl.BlockSpec(memory_space=pltpu.MemorySpace.SMEM),     # alpha
        ],
        out_specs=pl.BlockSpec((tm, hp), lambda i, k, nz_ref: (i, 0)),
        scratch_shapes=[pltpu.VMEM((tm, hp), jnp.float32)],
    )

    out = pl.pallas_call(
        functools.partial(_agg_kernel, nk=nk),
        out_shape=jax.ShapeDtypeStruct((np_, hp), jnp.float32),
        grid_spec=grid_spec,
        compiler_params=pltpu.CompilerParams(
            dimension_semantics=("parallel", "arbitrary"),
            vmem_limit_bytes=vmem_limit,
        ),
        cost_estimate=cost,
    )(nz, a_p, xw_p, b_p, alpha_arr)

    return out[:n, :n_h]


def reference_forward(seq, edge_index, w, b, alpha):
    """Pure-JAX reference matching the kernel's bf16 MXU operands."""
    a_hat = build_normalized_adj(edge_index, seq.shape[0])
    xw = jnp.dot(seq.astype(jnp.float32), w.astype(jnp.float32))
    a_bf = a_hat.astype(jnp.bfloat16).astype(jnp.float32)
    xw_bf = xw.astype(jnp.bfloat16).astype(jnp.float32)
    out = a_bf @ xw_bf + b[None, :]
    return jnp.where(out >= 0.0, out, alpha * out)


if __name__ == "__main__":
    # Small synthetic problem: N=16 nodes, n_in=8, n_h=32.
    N, N_IN, N_H = 16, 8, 32
    key = jax.random.PRNGKey(0)
    k_x, k_w = jax.random.split(key)

    # Node features.
    seq = jax.random.normal(k_x, (N, N_IN), dtype=jnp.float32)

    # Deterministic ring graph (both directions), no self loops.
    src = jnp.arange(N, dtype=jnp.int32)
    dst = (src + 1) % N
    edge_index = jnp.stack(
        [jnp.concatenate([src, dst]), jnp.concatenate([dst, src])], axis=0
    )  # [2, 2N]

    # GCNConv parameters: glorot-uniform weight, zero bias. PReLU alpha = 0.25.
    limit = jnp.sqrt(6.0 / (N_IN + N_H))
    w = jax.random.uniform(k_w, (N_IN, N_H), jnp.float32, -limit, limit)
    b = jnp.zeros((N_H,), jnp.float32)
    alpha = 0.25
    # TODO(synk): DGI.loss pieces (AvgReadout, Sigmoid, bilinear Discriminators)
    # are not on the DGI.forward path and are intentionally omitted.

    out = dgi_forward(seq, edge_index, w, b, alpha)
    out = jax.block_until_ready(out)

    ref = reference_forward(seq, edge_index, w, b, alpha)
    assert out.shape == (N, N_H)
    assert jnp.allclose(out, ref, atol=1e-3, rtol=1e-3), "kernel mismatch vs reference"

    print("KERNEL_OK")
</pallas_src>

<mosaic_0001>
module attributes {stable_mosaic.version = 11 : i64} {
  func.func @_agg_kernel(%arg0: i32, %arg1: i32, %arg2: memref<1xi32, #tpu.memory_space<smem>>, %arg3: memref<128x128xbf16, #tpu.memory_space<vmem>>, %arg4: memref<128x128xbf16, #tpu.memory_space<vmem>>, %arg5: memref<1x128xf32, #tpu.memory_space<vmem>>, %arg6: memref<1xf32, #tpu.memory_space<smem>>, %arg7: memref<128x128xf32, #tpu.memory_space<vmem>>, %arg8: memref<128x128xf32, #tpu.memory_space<vmem>>) attributes {dimension_semantics = [#tpu.dimension_semantics<parallel>, #tpu.dimension_semantics<arbitrary>], iteration_bounds = array<i64: 1, 1>, scalar_prefetch = 1 : i64, scratch_operands = 1 : i64, tpu.core_type = #tpu.core_type<tc>, window_params = [{transform_indices = @transform_0, window_bounds = array<i64: 128, 128>}, {transform_indices = @transform_1, window_bounds = array<i64: 128, 128>}, {pipeline_mode = #tpu.pipeline_mode<synchronous>, transform_indices = @transform_2, window_bounds = array<i64: 1, 128>}, {transform_indices = @transform_3, window_bounds = array<i64: 1>}, {transform_indices = @transform_4, window_bounds = array<i64: 128, 128>}]} {
    %c0_i32 = arith.constant 0 : i32
    %0 = arith.cmpi eq, %arg1, %c0_i32 : i32
    %1 = arith.extui %0 : i1 to i32
    %c0_i32_0 = arith.constant 0 : i32
    %2 = arith.cmpi ne, %1, %c0_i32_0 : i32
    scf.if %2 {
      %cst = arith.constant 0.000000e+00 : f32
      %13 = vector.broadcast %cst : f32 to vector<128x128xf32>
      %c0 = arith.constant 0 : index
      %c0_5 = arith.constant 0 : index
      %14 = vector.load %arg8[%c0, %c0_5] : memref<128x128xf32, #tpu.memory_space<vmem>>, vector<128x128xf32>
      tpu.vector_store %arg8[%c0, %c0_5], %13 {strides = array<i32>} : memref<128x128xf32, #tpu.memory_space<vmem>>, vector<128x128xf32>,
    } else {
    }
    %c1_i32 = arith.constant 1 : i32
    %3 = arith.muli %arg0, %c1_i32 : i32
    %4 = arith.addi %3, %arg1 : i32
    %5 = arith.index_cast %4 : i32 to index
    %6 = memref.load %arg2[%5] : memref<1xi32, #tpu.memory_space<smem>>
    %c0_i32_1 = arith.constant 0 : i32
    %7 = arith.cmpi ne, %6, %c0_i32_1 : i32
    %8 = arith.extui %7 : i1 to i32
    %c0_i32_2 = arith.constant 0 : i32
    %9 = arith.cmpi ne, %8, %c0_i32_2 : i32
    scf.if %9 {
      %c0 = arith.constant 0 : index
      %c0_5 = arith.constant 0 : index
      %13 = vector.load %arg8[%c0, %c0_5] : memref<128x128xf32, #tpu.memory_space<vmem>>, vector<128x128xf32>
      %c0_6 = arith.constant 0 : index
      %c0_7 = arith.constant 0 : index
      %14 = vector.load %arg3[%c0_6, %c0_7] : memref<128x128xbf16, #tpu.memory_space<vmem>>, vector<128x128xbf16>
      %c0_8 = arith.constant 0 : index
      %c0_9 = arith.constant 0 : index
      %15 = vector.load %arg4[%c0_8, %c0_9] : memref<128x128xbf16, #tpu.memory_space<vmem>>, vector<128x128xbf16>
      %cst = arith.constant dense<0.000000e+00> : vector<128x128xf32>
      %16 = tpu.matmul %14, %15, %cst {dimension_numbers = #tpu.dot_dimension_numbers<[1], [0], [0], [1], [0, 0, 1, 1], [], []>} : vector<128x128xbf16>, vector<128x128xbf16>, vector<128x128xf32> -> vector<128x128xf32>
      %17 = arith.addf %13, %16 : vector<128x128xf32>
      %c0_10 = arith.constant 0 : index
      %c0_11 = arith.constant 0 : index
      %18 = vector.load %arg8[%c0_10, %c0_11] : memref<128x128xf32, #tpu.memory_space<vmem>>, vector<128x128xf32>
      tpu.vector_store %arg8[%c0_10, %c0_11], %17 {strides = array<i32>} : memref<128x128xf32, #tpu.memory_space<vmem>>, vector<128x128xf32>,
    } else {
    }
    %c0_i32_3 = arith.constant 0 : i32
    %10 = arith.cmpi eq, %arg1, %c0_i32_3 : i32
    %11 = arith.extui %10 : i1 to i32
    %c0_i32_4 = arith.constant 0 : i32
    %12 = arith.cmpi ne, %11, %c0_i32_4 : i32
    scf.if %12 {
      %c0 = arith.constant 0 : index
      %13 = memref.load %arg6[%c0] : memref<1xf32, #tpu.memory_space<smem>>
      %c0_5 = arith.constant 0 : index
      %c0_6 = arith.constant 0 : index
      %14 = vector.load %arg8[%c0_5, %c0_6] : memref<128x128xf32, #tpu.memory_space<vmem>>, vector<128x128xf32>
      %c0_7 = arith.constant 0 : index
      %c0_8 = arith.constant 0 : index
      %15 = vector.load %arg5[%c0_7, %c0_8] : memref<1x128xf32, #tpu.memory_space<vmem>>, vector<1x128xf32>
      %16 = vector.broadcast %15 : vector<1x128xf32> to vector<128x128xf32>
      %17 = arith.addf %14, %16 : vector<128x128xf32>
      %cst = arith.constant 0.000000e+00 : f32
      %18 = vector.broadcast %cst : f32 to vector<128x128xf32>
      %19 = arith.cmpf oge, %17, %18 : vector<128x128xf32>
      %20 = vector.broadcast %13 : f32 to vector<128x128xf32>
      %21 = arith.mulf %20, %17 : vector<128x128xf32>
      %22 = arith.select %19, %17, %21 : vector<128x128xi1>, vector<128x128xf32>
      %c0_9 = arith.constant 0 : index
      %c0_10 = arith.constant 0 : index
      %23 = vector.load %arg7[%c0_9, %c0_10] : memref<128x128xf32, #tpu.memory_space<vmem>>, vector<128x128xf32>
      tpu.vector_store %arg7[%c0_9, %c0_10], %22 {strides = array<i32>} : memref<128x128xf32, #tpu.memory_space<vmem>>, vector<128x128xf32>,
    } else {
    }
    return
  }
  func.func @transform_0(%arg0: i32, %arg1: i32, %arg2: memref<1xi32, #tpu.memory_space<smem>>) -> (i32, i32) {
    %c0_i32 = arith.constant 0 : i32
    return %arg0, %arg1 : i32, i32
  }
  func.func @transform_1(%arg0: i32, %arg1: i32, %arg2: memref<1xi32, #tpu.memory_space<smem>>) -> (i32, i32) {
    %c0_i32 = arith.constant 0 : i32
    %c0_i32_0 = arith.constant 0 : i32
    return %arg1, %c0_i32 : i32, i32
  }
  func.func @transform_2(%arg0: i32, %arg1: i32, %arg2: memref<1xi32, #tpu.memory_space<smem>>) -> (i32, i32) {
    %c0_i32 = arith.constant 0 : i32
    %c0_i32_0 = arith.constant 0 : i32
    %c0_i32_1 = arith.constant 0 : i32
    return %c0_i32, %c0_i32_0 : i32, i32
  }
  func.func @transform_3(%arg0: i32, %arg1: i32, %arg2: memref<1xi32, #tpu.memory_space<smem>>) -> i32 {
    %c0_i32 = arith.constant 0 : i32
    %c0_i32_0 = arith.constant 0 : i32
    return %c0_i32 : i32
  }
  func.func @transform_4(%arg0: i32, %arg1: i32, %arg2: memref<1xi32, #tpu.memory_space<smem>>) -> (i32, i32) {
    %c0_i32 = arith.constant 0 : i32
    %c0_i32_0 = arith.constant 0 : i32
    return %arg0, %c0_i32 : i32, i32
  }
}

</mosaic_0001>

<llo_original>
// kernel: tpu_custom_call.1
$region0: #{tpu_custom_call.1}
  #allocation0 [shape = 'u32[]', space=smem, size = 0x4, offset = 0x4, fixed_abs, tag = 'smem constant byte address 0x4 - core index']
  #allocation1 [shape = 'u32[144,128]{1,0:T(1,128)}', space=vmem, size = 0x12000, scoped, tag = 'internal scratch']
  #allocation2 [shape = 'f32[128,128]{1,0:T(8,128)}', space=vmem, size = 0x10000, scoped, tag = 'scratch operand']
  #allocation3 [shape = 's32[1]{0}', space=sflag, size = 0x4, scoped, tag = 'scoped memory for tpu_custom_call.1']
  #allocation4 [shape = 's32[1]{0:T(128)S(6)}', space=smem, size = 0x200, scoped, tag = 'prefetched SMEM operand 0']
  #allocation5 [shape = 'f32[1]{0:T(128)S(6)}', space=smem, size = 0x200, scoped, tag = 'scoped memory for tpu_custom_call.1']
  %s0 = inlined_call_operand.<no memory space> [shape: s32[1], index: 0, kind: input, shape index: {}]
  %s1 = inlined_call_operand.hbm [shape: bf16[128,128], index: 1, kind: input, shape index: {}]
  %s2 = inlined_call_operand.hbm [shape: bf16[128,128], index: 2, kind: input, shape index: {}]
  %s3 = inlined_call_operand.vmem [shape: f32[1,128], index: 3, kind: input, shape index: {}]
  %s4 = inlined_call_operand.<no memory space> [shape: f32[1], index: 4, kind: input, shape index: {}]
  %s5 = inlined_call_operand.hbm [shape: f32[128,128], index: 5, kind: output, shape index: {}]
  %s6 = sld [smem:[#allocation0]]
  $region46: #{tpu_custom_call.1} parent=0
    _
  %s8 = ssub.s32 1, %s6
  %s9 = scalar_select 0, %s8, %s6
  %10 = sst [smem:[#allocation4]] %s0
  %11 = sst [smem:[#allocation5]] %s4
  $region1: #{tpu_custom_call.1} parent=0
    #allocation6 [shape = 'u8[32768]{0}', space=vmem, size = 0x8000, scoped, tag = 'input window, operand 1, single buffered']
    #allocation7 [shape = 's32[1]{0}', space=sflag, size = 0x4, scoped, tag = 'scoped memory for tpu_custom_call.1']
    #allocation8 [shape = 's32[1]{0}', space=sflag, size = 0x4, scoped, tag = 'scoped memory for tpu_custom_call.1']
    #allocation9 [shape = 'u8[32768]{0}', space=vmem, size = 0x8000, scoped, tag = 'input window, operand 2, single buffered']
    #allocation10 [shape = 's32[1]{0}', space=sflag, size = 0x4, scoped, tag = 'scoped memory for tpu_custom_call.1']
    #allocation11 [shape = 'u8[65536]{0}', space=vmem, size = 0x10000, scoped, tag = 'output window, operand 0, single buffered']
    %12 = vsyncpa [#allocation7], 0
    %13 = vsyncpa [#allocation10], 0
    %14 = vsyncpa [#allocation8], 0
    // Predicated region
    $region2: #{tpu_custom_call.1} parent=1 // pred_check
      _
    $region3: #{tpu_custom_call.1} parent=1 // pred_check_branch
      %16 = sbr.rel (0) target = $region5
    $region4: #{tpu_custom_call.1} parent=1 // pred_region
      %s18 = ssub.s32 1024, 1024
      %19 = vsyncadd [#allocation7], %s18
      %s20 = sshll.u32 [#allocation6], 4
      %s21 = int_to_ptr.vmem [resolvable:$true] %s20
      %26 = dma.hbm_to_vmem [thread:$0]  %s1, 1024, %s21, [#allocation7], 64, 64, 4
    $region5: #{tpu_custom_call.1} parent=1 // pred_fallthru
      _
    // Predicated region
    $region6: #{tpu_custom_call.1} parent=1 // pred_check
      _
    $region7: #{tpu_custom_call.1} parent=1 // pred_check_branch
      %28 = sbr.rel (0) target = $region9
    $region8: #{tpu_custom_call.1} parent=1 // pred_region
      %s30 = ssub.s32 1024, 1024
      %31 = vsyncadd [#allocation10], %s30
      %s32 = sshll.u32 [#allocation9], 4
      %s33 = int_to_ptr.vmem [resolvable:$true] %s32
      %38 = dma.hbm_to_vmem [thread:$0]  %s2, 1024, %s33, [#allocation10], 64, 64, 4
    $region9: #{tpu_custom_call.1} parent=1 // pred_fallthru
      _
    // Predicated region
    $region10: #{tpu_custom_call.1} parent=1 // pred_check
      _
    $region11: #{tpu_custom_call.1} parent=1 // pred_check_branch
      %40 = sbr.rel (0) target = $region13
    $region12: #{tpu_custom_call.1} parent=1 // pred_region
      _
    $region13: #{tpu_custom_call.1} parent=1 // pred_fallthru
      _
    // Predicated region
    $region14: #{tpu_custom_call.1} parent=1 // pred_check
      _
    $region15: #{tpu_custom_call.1} parent=1 // pred_check_branch
      %42 = sbr.rel (0) target = $region17
    $region16: #{tpu_custom_call.1} parent=1 // pred_region
      _
    $region17: #{tpu_custom_call.1} parent=1 // pred_fallthru
      _
    // Predicated region
    $region18: #{tpu_custom_call.1} parent=1 // pred_check
      _
    $region19: #{tpu_custom_call.1} parent=1 // pred_check_branch
      %44 = sbr.rel (0) target = $region21
    $region20: #{tpu_custom_call.1} parent=1 // pred_region
      %45 = dma.done [#allocation7], 1024
    $region21: #{tpu_custom_call.1} parent=1 // pred_fallthru
      _
    // Predicated region
    $region22: #{tpu_custom_call.1} parent=1 // pred_check
      _
    $region23: #{tpu_custom_call.1} parent=1 // pred_check_branch
      %47 = sbr.rel (0) target = $region25
    $region24: #{tpu_custom_call.1} parent=1 // pred_region
      %48 = dma.done [#allocation10], 1024
    $region25: #{tpu_custom_call.1} parent=1 // pred_fallthru
      _
    %p50 = scmp.eq.s32.totalorder 0, 0
    // Predicated region
    $region26: #{tpu_custom_call.1} parent=1 // pred_check
      %p51 = pneg %p50
    $region27: #{tpu_custom_call.1} parent=1 // pred_check_branch
      %53 = sbr.rel (%p51) target = $region29
    $region28: #{tpu_custom_call.1} parent=1 // pred_region
      %54 = vst [vmem:[#allocation2] sm:$0xff] 0.0
      %55 = vst [vmem:[#allocation2 + $0x8] sm:$0xff] 0.0
      %56 = vst [vmem:[#allocation2 + $0x10] sm:$0xff] 0.0
      %57 = vst [vmem:[#allocation2 + $0x18] sm:$0xff] 0.0
      %58 = vst [vmem:[#allocation2 + $0x20] sm:$0xff] 0.0
      %59 = vst [vmem:[#allocation2 + $0x28] sm:$0xff] 0.0
      %60 = vst [vmem:[#allocation2 + $0x30] sm:$0xff] 0.0
      %61 = vst [vmem:[#allocation2 + $0x38] sm:$0xff] 0.0
      %62 = vst [vmem:[#allocation2 + $0x40] sm:$0xff] 0.0
      %63 = vst [vmem:[#allocation2 + $0x48] sm:$0xff] 0.0
      %64 = vst [vmem:[#allocation2 + $0x50] sm:$0xff] 0.0
      %65 = vst [vmem:[#allocation2 + $0x58] sm:$0xff] 0.0
      %66 = vst [vmem:[#allocation2 + $0x60] sm:$0xff] 0.0
      %67 = vst [vmem:[#allocation2 + $0x68] sm:$0xff] 0.0
      %68 = vst [vmem:[#allocation2 + $0x70] sm:$0xff] 0.0
      %69 = vst [vmem:[#allocation2 + $0x78] sm:$0xff] 0.0
    $region29: #{tpu_custom_call.1} parent=1 // pred_fallthru
      _
    %s70 = sadd.s32 0, 0
    %s71 = sld [smem:[#allocation4 + %s70]]
    %p72 = scmp.ne.s32.totalorder %s71, 0
    // Predicated region
    $region30: #{tpu_custom_call.1} parent=1 // pred_check
      %p73 = pneg %p72
    $region31: #{tpu_custom_call.1} parent=1 // pred_check_branch
      %75 = sbr.rel (%p73) target = $region33
    $region32: #{tpu_custom_call.1} parent=1 // pred_region
      %v76 = vld [vmem:[#allocation2] sm:$0xff]
      %v77 = vld [vmem:[#allocation2 + $0x8] sm:$0xff]
      %v78 = vld [vmem:[#allocation2 + $0x10] sm:$0xff]
      %v79 = vld [vmem:[#allocation2 + $0x18] sm:$0xff]
      %v80 = vld [vmem:[#allocation2 + $0x20] sm:$0xff]
      %v81 = vld [vmem:[#allocation2 + $0x28] sm:$0xff]
      %v82 = vld [vmem:[#allocation2 + $0x30] sm:$0xff]
      %v83 = vld [vmem:[#allocation2 + $0x38] sm:$0xff]
      %v84 = vld [vmem:[#allocation2 + $0x40] sm:$0xff]
      %v85 = vld [vmem:[#allocation2 + $0x48] sm:$0xff]
      %v86 = vld [vmem:[#allocation2 + $0x50] sm:$0xff]
      %v87 = vld [vmem:[#allocation2 + $0x58] sm:$0xff]
      %v88 = vld [vmem:[#allocation2 + $0x60] sm:$0xff]
      %v89 = vld [vmem:[#allocation2 + $0x68] sm:$0xff]
      %v90 = vld [vmem:[#allocation2 + $0x70] sm:$0xff]
      %v91 = vld [vmem:[#allocation2 + $0x78] sm:$0xff]
      %v92 = vld [vmem:[#allocation6] sm:$0xf]
      %v93 = vld [vmem:[#allocation6 + $0x4] sm:$0xf]
      %v94 = vld [vmem:[#allocation6 + $0x8] sm:$0xf]
      %v95 = vld [vmem:[#allocation6 + $0xc] sm:$0xf]
      %v96 = vld [vmem:[#allocation6 + $0x10] sm:$0xf]
      %v97 = vld [vmem:[#allocation6 + $0x14] sm:$0xf]
      %v98 = vld [vmem:[#allocation6 + $0x18] sm:$0xf]
      %v99 = vld [vmem:[#allocation6 + $0x1c] sm:$0xf]
      %v100 = vld [vmem:[#allocation6 + $0x20] sm:$0xf]
      %v101 = vld [vmem:[#allocation6 + $0x24] sm:$0xf]
      %v102 = vld [vmem:[#allocation6 + $0x28] sm:$0xf]
      %v103 = vld [vmem:[#allocation6 + $0x2c] sm:$0xf]
      %v104 = vld [vmem:[#allocation6 + $0x30] sm:$0xf]
      %v105 = vld [vmem:[#allocation6 + $0x34] sm:$0xf]
      %v106 = vld [vmem:[#allocation6 + $0x38] sm:$0xf]
      %v107 = vld [vmem:[#allocation6 + $0x3c] sm:$0xf]
      %v108 = vld [vmem:[#allocation9] sm:$0xf]
      %v109 = vld [vmem:[#allocation9 + $0x4] sm:$0xf]
      %v110 = vld [vmem:[#allocation9 + $0x8] sm:$0xf]
      %v111 = vld [vmem:[#allocation9 + $0xc] sm:$0xf]
      %v112 = vld [vmem:[#allocation9 + $0x10] sm:$0xf]
      %v113 = vld [vmem:[#allocation9 + $0x14] sm:$0xf]
      %v114 = vld [vmem:[#allocation9 + $0x18] sm:$0xf]
      %v115 = vld [vmem:[#allocation9 + $0x1c] sm:$0xf]
      %v116 = vld [vmem:[#allocation9 + $0x20] sm:$0xf]
      %v117 = vld [vmem:[#allocation9 + $0x24] sm:$0xf]
      %v118 = vld [vmem:[#allocation9 + $0x28] sm:$0xf]
      %v119 = vld [vmem:[#allocation9 + $0x2c] sm:$0xf]
      %v120 = vld [vmem:[#allocation9 + $0x30] sm:$0xf]
      %v121 = vld [vmem:[#allocation9 + $0x34] sm:$0xf]
      %v122 = vld [vmem:[#allocation9 + $0x38] sm:$0xf]
      %v123 = vld [vmem:[#allocation9 + $0x3c] sm:$0xf]
      %v140 = vunpack.c.l.b16 %v92
      %v141 = vunpack.c.l.b16 %v93
      %v142 = vunpack.c.l.b16 %v94
      %v143 = vunpack.c.l.b16 %v95
      %v144 = vunpack.c.l.b16 %v96
      %v145 = vunpack.c.l.b16 %v97
      %v146 = vunpack.c.l.b16 %v98
      %v147 = vunpack.c.l.b16 %v99
      %v148 = vunpack.c.l.b16 %v100
      %v149 = vunpack.c.l.b16 %v101
      %v150 = vunpack.c.l.b16 %v102
      %v151 = vunpack.c.l.b16 %v103
      %v152 = vunpack.c.l.b16 %v104
      %v153 = vunpack.c.l.b16 %v105
      %v154 = vunpack.c.l.b16 %v106
      %v155 = vunpack.c.l.b16 %v107
      %v156 = vpack.c.b16 %v141, %v140
      %v157 = vpack.c.b16 %v143, %v142
      %v158 = vpack.c.b16 %v145, %v144
      %v159 = vpack.c.b16 %v147, %v146
      %v160 = vpack.c.b16 %v149, %v148
      %v161 = vpack.c.b16 %v151, %v150
      %v162 = vpack.c.b16 %v153, %v152
      %v163 = vpack.c.b16 %v155, %v154
      %v188 = vunpack.c.l.b16 %v108
      %v189 = vunpack.c.l.b16 %v109
      %v190 = vunpack.c.l.b16 %v110
      %v191 = vunpack.c.l.b16 %v111
      %v192 = vunpack.c.l.b16 %v112
      %v193 = vunpack.c.l.b16 %v113
      %v194 = vunpack.c.l.b16 %v114
      %v195 = vunpack.c.l.b16 %v115
      %v196 = vunpack.c.l.b16 %v116
      %v197 = vunpack.c.l.b16 %v117
      %v198 = vunpack.c.l.b16 %v118
      %v199 = vunpack.c.l.b16 %v119
      %v200 = vunpack.c.l.b16 %v120
      %v201 = vunpack.c.l.b16 %v121
      %v202 = vunpack.c.l.b16 %v122
      %v203 = vunpack.c.l.b16 %v123
      %v204 = vpack.c.b16 %v189, %v188
      %v205 = vpack.c.b16 %v191, %v190
      %v206 = vpack.c.b16 %v193, %v192
      %v207 = vpack.c.b16 %v195, %v194
      %v208 = vpack.c.b16 %v197, %v196
      %v209 = vpack.c.b16 %v199, %v198
      %v210 = vpack.c.b16 %v201, %v200
      %v211 = vpack.c.b16 %v203, %v202
      %220 = vmatprep.subr.bf16.mxu0 0
      %221 = vmatpush1.bf16.msra.mxu0 %v204
      %222 = vmatprep.subr.bf16.mxu0 0
      %223 = vmatpush1.bf16.msra.mxu0 %v205
      %224 = vmatprep.subr.bf16.mxu0 0
      %225 = vmatpush1.bf16.msra.mxu0 %v206
      %226 = vmatprep.subr.bf16.mxu0 0
      %227 = vmatpush1.bf16.msra.mxu0 %v207
      %228 = vmatprep.subr.bf16.mxu0 0
      %229 = vmatpush1.bf16.msra.mxu0 %v208
      %230 = vmatprep.subr.bf16.mxu0 0
      %231 = vmatpush1.bf16.msra.mxu0 %v209
      %232 = vmatprep.subr.bf16.mxu0 0
      %233 = vmatpush1.bf16.msra.mxu0 %v210
      %234 = vmatprep.subr.bf16.mxu0 0
      %235 = vmatpush1.bf16.msra.mxu0 %v211
      %236 = vmatprep.subr.bf16.mxu0 0
      %237 = vmatpush1.bf16.msra.mxu0 0
      %238 = vmatprep.subr.bf16.mxu0 0
      %239 = vmatpush1.bf16.msra.mxu0 0
      %240 = vmatprep.subr.bf16.mxu0 0
      %241 = vmatpush1.bf16.msra.mxu0 0
      %242 = vmatprep.subr.bf16.mxu0 0
      %243 = vmatpush1.bf16.msra.mxu0 0
      %244 = vmatprep.subr.bf16.mxu0 0
      %245 = vmatpush1.bf16.msra.mxu0 0
      %246 = vmatprep.subr.bf16.mxu0 0
      %247 = vmatpush1.bf16.msra.mxu0 0
      %248 = vmatprep.subr.bf16.mxu0 0
      %249 = vmatpush1.bf16.msra.mxu0 0
      %250 = vmatprep.subr.bf16.mxu0 0
      %251 = vmatpush1.bf16.msra.mxu0 0
      %252 = vmatprep.mubr.bf16.mxu0 0
      %253 = vmatmul.mubr.bf16.gmra.mrb[0].mxu0 %v156
      %v254 = vpop.f32.mrb[0].mxu0
      %v255 = vadd.f32 0.0, %v254
      %v256 = vpop.f32.mrb[0].mxu0
      %v257 = vpop.f32.mrb[0].mxu0
      %v258 = vadd.f32 0.0, %v257
      %v259 = vpop.f32.mrb[0].mxu0
      %260 = vmatprep.mubr.bf16.mxu0 0
      %261 = vmatmul.mubr.bf16.gmra.mrb[0].mxu0 %v157
      %v262 = vpop.f32.mrb[0].mxu0
      %v263 = vadd.f32 0.0, %v262
      %v264 = vpop.f32.mrb[0].mxu0
      %v265 = vpop.f32.mrb[0].mxu0
      %v266 = vadd.f32 0.0, %v265
      %v267 = vpop.f32.mrb[0].mxu0
      %268 = vmatprep.mubr.bf16.mxu0 0
      %269 = vmatmul.mubr.bf16.gmra.mrb[0].mxu0 %v158
      %v270 = vpop.f32.mrb[0].mxu0
      %v271 = vadd.f32 0.0, %v270
      %v272 = vpop.f32.mrb[0].mxu0
      %v273 = vpop.f32.mrb[0].mxu0
      %v274 = vadd.f32 0.0, %v273
      %v275 = vpop.f32.mrb[0].mxu0
      %276 = vmatprep.mubr.bf16.mxu0 0
      %277 = vmatmul.mubr.bf16.gmra.mrb[0].mxu0 %v159
      %v278 = vpop.f32.mrb[0].mxu0
      %v279 = vadd.f32 0.0, %v278
      %v280 = vpop.f32.mrb[0].mxu0
      %v281 = vpop.f32.mrb[0].mxu0
      %v282 = vadd.f32 0.0, %v281
      %v283 = vpop.f32.mrb[0].mxu0
      %284 = vmatprep.mubr.bf16.mxu0 0
      %285 = vmatmul.mubr.bf16.gmra.mrb[0].mxu0 %v160
      %v286 = vpop.f32.mrb[0].mxu0
      %v287 = vadd.f32 0.0, %v286
      %v288 = vpop.f32.mrb[0].mxu0
      %v289 = vpop.f32.mrb[0].mxu0
      %v290 = vadd.f32 0.0, %v289
      %v291 = vpop.f32.mrb[0].mxu0
      %292 = vmatprep.mubr.bf16.mxu0 0
      %293 = vmatmul.mubr.bf16.gmra.mrb[0].mxu0 %v161
      %v294 = vpop.f32.mrb[0].mxu0
      %v295 = vadd.f32 0.0, %v294
      %v296 = vpop.f32.mrb[0].mxu0
      %v297 = vpop.f32.mrb[0].mxu0
      %v298 = vadd.f32 0.0, %v297
      %v299 = vpop.f32.mrb[0].mxu0
      %300 = vmatprep.mubr.bf16.mxu0 0
      %301 = vmatmul.mubr.bf16.gmra.mrb[0].mxu0 %v162
      %v302 = vpop.f32.mrb[0].mxu0
      %v303 = vadd.f32 0.0, %v302
      %v304 = vpop.f32.mrb[0].mxu0
      %v305 = vpop.f32.mrb[0].mxu0
      %v306 = vadd.f32 0.0, %v305
      %v307 = vpop.f32.mrb[0].mxu0
      %308 = vmatprep.mubr.bf16.mxu0 0
      %309 = vmatmul.mubr.bf16.gmra.mrb[0].mxu0 %v163
      %v310 = vpop.f32.mrb[0].mxu0
      %v311 = vadd.f32 0.0, %v310
      %v312 = vpop.f32.mrb[0].mxu0
      %v313 = vpop.f32.mrb[0].mxu0
      %v314 = vadd.f32 0.0, %v313
      %v315 = vpop.f32.mrb[0].mxu0
      %316 = vdwg.mxu0
      %v317 = vadd.f32 %v76, %v255
      %v318 = vadd.f32 %v77, %v258
      %v319 = vadd.f32 %v78, %v263
      %v320 = vadd.f32 %v79, %v266
      %v321 = vadd.f32 %v80, %v271
      %v322 = vadd.f32 %v81, %v274
      %v323 = vadd.f32 %v82, %v279
      %v324 = vadd.f32 %v83, %v282
      %v325 = vadd.f32 %v84, %v287
      %v326 = vadd.f32 %v85, %v290
      %v327 = vadd.f32 %v86, %v295
      %v328 = vadd.f32 %v87, %v298
      %v329 = vadd.f32 %v88, %v303
      %v330 = vadd.f32 %v89, %v306
      %v331 = vadd.f32 %v90, %v311
      %v332 = vadd.f32 %v91, %v314
      %333 = vst [vmem:[#allocation2] sm:$0xff] %v317
      %334 = vst [vmem:[#allocation2 + $0x8] sm:$0xff] %v318
      %335 = vst [vmem:[#allocation2 + $0x10] sm:$0xff] %v319
      %336 = vst [vmem:[#allocation2 + $0x18] sm:$0xff] %v320
      %337 = vst [vmem:[#allocation2 + $0x20] sm:$0xff] %v321
      %338 = vst [vmem:[#allocation2 + $0x28] sm:$0xff] %v322
      %339 = vst [vmem:[#allocation2 + $0x30] sm:$0xff] %v323
      %340 = vst [vmem:[#allocation2 + $0x38] sm:$0xff] %v324
      %341 = vst [vmem:[#allocation2 + $0x40] sm:$0xff] %v325
      %342 = vst [vmem:[#allocation2 + $0x48] sm:$0xff] %v326
      %343 = vst [vmem:[#allocation2 + $0x50] sm:$0xff] %v327
      %344 = vst [vmem:[#allocation2 + $0x58] sm:$0xff] %v328
      %345 = vst [vmem:[#allocation2 + $0x60] sm:$0xff] %v329
      %346 = vst [vmem:[#allocation2 + $0x68] sm:$0xff] %v330
      %347 = vst [vmem:[#allocation2 + $0x70] sm:$0xff] %v331
      %348 = vst [vmem:[#allocation2 + $0x78] sm:$0xff] %v332
    $region33: #{tpu_custom_call.1} parent=1 // pred_fallthru
      _
    // Predicated region
    $region34: #{tpu_custom_call.1} parent=1 // pred_check
      %p349 = pneg %p50
    $region35: #{tpu_custom_call.1} parent=1 // pred_check_branch
      %351 = sbr.rel (%p349) target = $region37
    $region36: #{tpu_custom_call.1} parent=1 // pred_region
      %s352 = sld [smem:[#allocation5]]
      %v353 = vld [vmem:[#allocation2] sm:$0xff]
      %v354 = vld [vmem:[#allocation2 + $0x8] sm:$0xff]
      %v355 = vld [vmem:[#allocation2 + $0x10] sm:$0xff]
      %v356 = vld [vmem:[#allocation2 + $0x18] sm:$0xff]
      %v357 = vld [vmem:[#allocation2 + $0x20] sm:$0xff]
      %v358 = vld [vmem:[#allocation2 + $0x28] sm:$0xff]
      %v359 = vld [vmem:[#allocation2 + $0x30] sm:$0xff]
      %v360 = vld [vmem:[#allocation2 + $0x38] sm:$0xff]
      %v361 = vld [vmem:[#allocation2 + $0x40] sm:$0xff]
      %v362 = vld [vmem:[#allocation2 + $0x48] sm:$0xff]
      %v363 = vld [vmem:[#allocation2 + $0x50] sm:$0xff]
      %v364 = vld [vmem:[#allocation2 + $0x58] sm:$0xff]
      %v365 = vld [vmem:[#allocation2 + $0x60] sm:$0xff]
      %v366 = vld [vmem:[#allocation2 + $0x68] sm:$0xff]
      %v367 = vld [vmem:[#allocation2 + $0x70] sm:$0xff]
      %v368 = vld [vmem:[#allocation2 + $0x78] sm:$0xff]
      %v369 = vld [vmem:[%s3] sm:$0x1]
      %v371 = vlaneseq
      %v372 = vshrl.u32 %v371, 7
      %v373 = vsub.s32 0, %v372
      %v374 = vrot.slane %v369, %v373
      %v376 = vadd.f32 %v353, %v374
      %v377 = vadd.f32 %v354, %v374
      %v378 = vadd.f32 %v355, %v374
      %v379 = vadd.f32 %v356, %v374
      %v380 = vadd.f32 %v357, %v374
      %v381 = vadd.f32 %v358, %v374
      %v382 = vadd.f32 %v359, %v374
      %v383 = vadd.f32 %v360, %v374
      %v384 = vadd.f32 %v361, %v374
      %v385 = vadd.f32 %v362, %v374
      %v386 = vadd.f32 %v363, %v374
      %v387 = vadd.f32 %v364, %v374
      %v388 = vadd.f32 %v365, %v374
      %v389 = vadd.f32 %v366, %v374
      %v390 = vadd.f32 %v367, %v374
      %v391 = vadd.f32 %v368, %v374
      %vm392 = vcmp.ge.f32.partialorder %v376, 0.0
      %vm393 = vcmp.ge.f32.partialorder %v377, 0.0
      %vm394 = vcmp.ge.f32.partialorder %v378, 0.0
      %vm395 = vcmp.ge.f32.partialorder %v379, 0.0
      %vm396 = vcmp.ge.f32.partialorder %v380, 0.0
      %vm397 = vcmp.ge.f32.partialorder %v381, 0.0
      %vm398 = vcmp.ge.f32.partialorder %v382, 0.0
      %vm399 = vcmp.ge.f32.partialorder %v383, 0.0
      %vm400 = vcmp.ge.f32.partialorder %v384, 0.0
      %vm401 = vcmp.ge.f32.partialorder %v385, 0.0
      %vm402 = vcmp.ge.f32.partialorder %v386, 0.0
      %vm403 = vcmp.ge.f32.partialorder %v387, 0.0
      %vm404 = vcmp.ge.f32.partialorder %v388, 0.0
      %vm405 = vcmp.ge.f32.partialorder %v389, 0.0
      %vm406 = vcmp.ge.f32.partialorder %v390, 0.0
      %vm407 = vcmp.ge.f32.partialorder %v391, 0.0
      %v408 = vstv %s352
      %v409 = vmul.f32 %v408, %v376
      %v410 = vmul.f32 %v408, %v377
      %v411 = vmul.f32 %v408, %v378
      %v412 = vmul.f32 %v408, %v379
      %v413 = vmul.f32 %v408, %v380
      %v414 = vmul.f32 %v408, %v381
      %v415 = vmul.f32 %v408, %v382
      %v416 = vmul.f32 %v408, %v383
      %v417 = vmul.f32 %v408, %v384
      %v418 = vmul.f32 %v408, %v385
      %v419 = vmul.f32 %v408, %v386
      %v420 = vmul.f32 %v408, %v387
      %v421 = vmul.f32 %v408, %v388
      %v422 = vmul.f32 %v408, %v389
      %v423 = vmul.f32 %v408, %v390
      %v424 = vmul.f32 %v408, %v391
      %v425 = vsel %vm392, %v376, %v409
      %v426 = vsel %vm393, %v377, %v410
      %v427 = vsel %vm394, %v378, %v411
      %v428 = vsel %vm395, %v379, %v412
      %v429 = vsel %vm396, %v380, %v413
      %v430 = vsel %vm397, %v381, %v414
      %v431 = vsel %vm398, %v382, %v415
      %v432 = vsel %vm399, %v383, %v416
      %v433 = vsel %vm400, %v384, %v417
      %v434 = vsel %vm401, %v385, %v418
      %v435 = vsel %vm402, %v386, %v419
      %v436 = vsel %vm403, %v387, %v420
      %v437 = vsel %vm404, %v388, %v421
      %v438 = vsel %vm405, %v389, %v422
      %v439 = vsel %vm406, %v390, %v423
      %v440 = vsel %vm407, %v391, %v424
      %441 = vst [vmem:[#allocation11] sm:$0xff] %v425
      %442 = vst [vmem:[#allocation11 + $0x8] sm:$0xff] %v426
      %443 = vst [vmem:[#allocation11 + $0x10] sm:$0xff] %v427
      %444 = vst [vmem:[#allocation11 + $0x18] sm:$0xff] %v428
      %445 = vst [vmem:[#allocation11 + $0x20] sm:$0xff] %v429
      %446 = vst [vmem:[#allocation11 + $0x28] sm:$0xff] %v430
      %447 = vst [vmem:[#allocation11 + $0x30] sm:$0xff] %v431
      %448 = vst [vmem:[#allocation11 + $0x38] sm:$0xff] %v432
      %449 = vst [vmem:[#allocation11 + $0x40] sm:$0xff] %v433
      %450 = vst [vmem:[#allocation11 + $0x48] sm:$0xff] %v434
      %451 = vst [vmem:[#allocation11 + $0x50] sm:$0xff] %v435
      %452 = vst [vmem:[#allocation11 + $0x58] sm:$0xff] %v436
      %453 = vst [vmem:[#allocation11 + $0x60] sm:$0xff] %v437
      %454 = vst [vmem:[#allocation11 + $0x68] sm:$0xff] %v438
      %455 = vst [vmem:[#allocation11 + $0x70] sm:$0xff] %v439
      %456 = vst [vmem:[#allocation11 + $0x78] sm:$0xff] %v440
    $region37: #{tpu_custom_call.1} parent=1 // pred_fallthru
      _
    // Predicated region
    $region38: #{tpu_custom_call.1} parent=1 // pred_check
      _
    $region39: #{tpu_custom_call.1} parent=1 // pred_check_branch
      %458 = sbr.rel (0) target = $region41
    $region40: #{tpu_custom_call.1} parent=1 // pred_region
      %s460 = ssub.s32 2048, 2048
      %461 = vsyncadd [#allocation8], %s460
      %s462 = sshll.u32 [#allocation11], 4
      %s463 = int_to_ptr.vmem [resolvable:$true] %s462
      %468 = dma.vmem_to_hbm [thread:$0]  %s463, 2048, %s5, [#allocation8], 128, 128, 8
    $region41: #{tpu_custom_call.1} parent=1 // pred_fallthru
      _
    // Predicated region
    $region42: #{tpu_custom_call.1} parent=1 // pred_check
      _
    $region43: #{tpu_custom_call.1} parent=1 // pred_check_branch
      %470 = sbr.rel (0) target = $region45
    $region44: #{tpu_custom_call.1} parent=1 // pred_region
      %471 = dma.done [#allocation8], 2048
    $region45: #{tpu_custom_call.1} parent=1 // pred_fallthru
      _
    %472 = vsyncpa [#allocation7], 1
    %473 = vsyncpa [#allocation10], 1
    %474 = vsyncpa [#allocation8], 1

</llo_original>
